<compile_context>
chip_gen: v7x
topology: tpu7x:2x2x1
jax: 0.10.0
libtpu: 0.0.40
codegen_flags: <defaults>
</compile_context>

<pallas_src>
import functools
import math

import jax
import jax.numpy as jnp
from jax.experimental import pallas as pl
from jax.experimental.pallas import tpu as pltpu


def _ensemble_kernel(x_ref, w_ref, b_ref, out_ref, *, n_models, k):
    """One wide MXU matmul for all ensemble members + in-register average.

    x_ref:   (B_pad, D)      bf16
    w_ref:   (D, N_pad)      bf16; columns [i*K:(i+1)*K] = W_i, rest zero-pad
    b_ref:   (1, N_pad)      f32
    out_ref: (B_pad, N_pad)  f32; cols [0:N*K] = per-model logits,
                             [N*K:(N+1)*K] = ensemble average, rest zero
    """
    # Single fused matmul on the MXU, f32 accumulation.
    logits = (
        jnp.dot(x_ref[...], w_ref[...], preferred_element_type=jnp.float32)
        + b_ref[...]
    )

    # Ensemble average over the N model column-groups (exact mean-of-logits,
    # matching `outputs_old += model(x); outputs_old / len(models)`).
    acc = logits[:, 0:k]
    for i in range(1, n_models):
        acc = acc + logits[:, i * k:(i + 1) * k]
    avg = acc * (1.0 / n_models)

    nk = n_models * k
    pad = out_ref.shape[1] - (nk + k)
    pieces = [logits[:, :nk], avg]
    if pad:
        pieces.append(jnp.zeros((logits.shape[0], pad), jnp.float32))
    # One lane-dense 128-wide store.
    out_ref[...] = jnp.concatenate(pieces, axis=1)


def ensemble_forward(x, weights, biases):
    """x: (B, C, H, W) f32; weights: (N, D, K) f32; biases: (N, K) f32.

    Returns [logits_0, ..., logits_{N-1}, avg, avg] matching the PyTorch
    Ensemble.forward contract.
    """
    n_models, d, k = weights.shape
    b = x.shape[0]
    nk = n_models * k

    # Lane-dense fused output width: per-model logits + avg, padded to 128.
    n_pad = max(128, math.ceil((nk + k) / 128) * 128)
    # Sublane-friendly batch (MXU LHS rows).
    b_pad = max(8, math.ceil(b / 8) * 8)

    x_flat = x.reshape(b, d)
    if b_pad > b:
        x_flat = jnp.pad(x_flat, ((0, b_pad - b), (0, 0)))

    # (N, D, K) -> (D, N*K): column block i holds W_i; zero-pad lanes to n_pad.
    w_fused = jnp.transpose(weights, (1, 0, 2)).reshape(d, nk)
    w_fused = jnp.pad(w_fused, ((0, 0), (0, n_pad - nk)))
    b_fused = jnp.pad(biases.reshape(1, nk), ((0, 0), (0, n_pad - nk)))

    # bf16 MXU inputs; accumulation stays f32 inside the kernel.
    x_bf = x_flat.astype(jnp.bfloat16)
    w_bf = w_fused.astype(jnp.bfloat16)

    out_slab = pl.pallas_call(
        functools.partial(_ensemble_kernel, n_models=n_models, k=k),
        out_shape=jax.ShapeDtypeStruct((b_pad, n_pad), jnp.float32),
        in_specs=[
            pl.BlockSpec((b_pad, d), lambda: (0, 0)),    # x (resident)
            pl.BlockSpec((d, n_pad), lambda: (0, 0)),    # fused weights
            pl.BlockSpec((1, n_pad), lambda: (0, 0)),    # fused bias (resident)
        ],
        out_specs=pl.BlockSpec((b_pad, n_pad), lambda: (0, 0)),
        compiler_params=pltpu.CompilerParams(
            vmem_limit_bytes=32 * 1024 * 1024,
        ),
    )(x_bf, w_bf, b_fused)

    # Single slice + split (no per-model gather HLOs over HBM).
    useful = out_slab[:b, : nk + k]
    pieces = jnp.split(useful, n_models + 1, axis=1)
    outputs = list(pieces[:n_models])
    outputs.append(pieces[n_models])
    outputs.append(pieces[n_models])
    return outputs


if __name__ == "__main__":
    # Small shapes consistent with the module's forward.
    B, C, H, W = 2, 4, 16, 16
    N_MODELS = 3
    NUM_CLASSES = 16  # >= 11 so get_output_scale's topk(10) would be valid
    D = C * H * W

    key = jax.random.PRNGKey(0)
    kx, kw, kb = jax.random.split(key, 3)
    x = jax.random.normal(kx, (B, C, H, W), dtype=jnp.float32)
    weights = 0.02 * jax.random.normal(kw, (N_MODELS, D, NUM_CLASSES), jnp.float32)
    biases = 0.01 * jax.random.normal(kb, (N_MODELS, NUM_CLASSES), jnp.float32)

    outs = ensemble_forward(x, weights, biases)
    outs = [jax.block_until_ready(o) for o in outs]

    # Pure-JAX reference using the same bf16 input/weight quantization the
    # kernel uses (with f32 accumulation), so tolerances stay tight.
    x_flat = x.reshape(B, D)
    xq = x_flat.astype(jnp.bfloat16).astype(jnp.float32)
    wq = weights.astype(jnp.bfloat16).astype(jnp.float32)
    ref_logits = [xq @ wq[i] + biases[i] for i in range(N_MODELS)]
    ref_avg = sum(ref_logits) / N_MODELS
    ref = ref_logits + [ref_avg, ref_avg]

    assert len(outs) == N_MODELS + 2
    for got, want in zip(outs, ref):
        assert got.shape == want.shape, (got.shape, want.shape)
        assert jnp.allclose(got, want, atol=1e-4, rtol=1e-4)

    print("KERNEL_OK")
</pallas_src>

<mosaic_0001>
module attributes {stable_mosaic.version = 11 : i64} {
  func.func @_ensemble_kernel(%arg0: memref<8x1024xbf16, #tpu.memory_space<vmem>>, %arg1: memref<1024x128xbf16, #tpu.memory_space<vmem>>, %arg2: memref<1x128xf32, #tpu.memory_space<vmem>>, %arg3: memref<8x128xf32, #tpu.memory_space<vmem>>) attributes {dimension_semantics = [], scalar_prefetch = 0 : i64, scratch_operands = 0 : i64, tpu.core_type = #tpu.core_type<tc>} {
    %c0 = arith.constant 0 : index
    %c0_0 = arith.constant 0 : index
    %0 = vector.load %arg0[%c0, %c0_0] : memref<8x1024xbf16, #tpu.memory_space<vmem>>, vector<8x1024xbf16>
    %c0_1 = arith.constant 0 : index
    %c0_2 = arith.constant 0 : index
    %1 = vector.load %arg1[%c0_1, %c0_2] : memref<1024x128xbf16, #tpu.memory_space<vmem>>, vector<1024x128xbf16>
    %cst = arith.constant dense<0.000000e+00> : vector<8x128xf32>
    %2 = tpu.matmul %0, %1, %cst {dimension_numbers = #tpu.dot_dimension_numbers<[1], [0], [0], [1], [0, 0, 1, 1], [], []>} : vector<8x1024xbf16>, vector<1024x128xbf16>, vector<8x128xf32> -> vector<8x128xf32>
    %c0_3 = arith.constant 0 : index
    %c0_4 = arith.constant 0 : index
    %3 = vector.load %arg2[%c0_3, %c0_4] : memref<1x128xf32, #tpu.memory_space<vmem>>, vector<1x128xf32>
    %4 = vector.broadcast %3 : vector<1x128xf32> to vector<8x128xf32>
    %5 = arith.addf %2, %4 : vector<8x128xf32>
    %6 = vector.extract_strided_slice %5 {offsets = [0, 0], sizes = [8, 16], strides = [1, 1]} : vector<8x128xf32> to vector<8x16xf32>
    %7 = vector.extract_strided_slice %5 {offsets = [0, 16], sizes = [8, 16], strides = [1, 1]} : vector<8x128xf32> to vector<8x16xf32>
    %8 = arith.addf %6, %7 : vector<8x16xf32>
    %9 = vector.extract_strided_slice %5 {offsets = [0, 32], sizes = [8, 16], strides = [1, 1]} : vector<8x128xf32> to vector<8x16xf32>
    %10 = arith.addf %8, %9 : vector<8x16xf32>
    %cst_5 = arith.constant 0.333333343 : f32
    %11 = vector.broadcast %cst_5 : f32 to vector<8x16xf32>
    %12 = arith.mulf %10, %11 : vector<8x16xf32>
    %13 = vector.extract_strided_slice %5 {offsets = [0, 0], sizes = [8, 48], strides = [1, 1]} : vector<8x128xf32> to vector<8x48xf32>
    %cst_6 = arith.constant 0.000000e+00 : f32
    %14 = vector.broadcast %cst_6 : f32 to vector<8x64xf32>
    %15 = tpu.concatenate %13, %12, %14 in 1 : vector<8x48xf32>, vector<8x16xf32>, vector<8x64xf32> -> vector<8x128xf32>
    %c0_7 = arith.constant 0 : index
    %c0_8 = arith.constant 0 : index
    %16 = vector.load %arg3[%c0_7, %c0_8] : memref<8x128xf32, #tpu.memory_space<vmem>>, vector<8x128xf32>
    tpu.vector_store %arg3[%c0_7, %c0_8], %15 {strides = array<i32>} : memref<8x128xf32, #tpu.memory_space<vmem>>, vector<8x128xf32>,
    return
  }
}

</mosaic_0001>

<llo_original>
// kernel: tpu_custom_call.1
$region0: #{tpu_custom_call.1}
  #allocation0 [shape = 'u32[]', space=smem, size = 0x4, offset = 0x4, fixed_abs, tag = 'smem constant byte address 0x4 - core index']
  #allocation1 [shape = 'u32[144,128]{1,0:T(1,128)}', space=vmem, size = 0x12000, scoped, tag = 'internal scratch']
  %s0 = inlined_call_operand.hbm [shape: bf16[8,1024], index: 0, kind: input, shape index: {}]
  %s1 = inlined_call_operand.hbm [shape: bf16[1024,128], index: 1, kind: input, shape index: {}]
  %s2 = inlined_call_operand.vmem [shape: f32[1,128], index: 2, kind: input, shape index: {}]
  %s3 = inlined_call_operand.hbm [shape: f32[8,128], index: 3, kind: output, shape index: {}]
  %s4 = sld [smem:[#allocation0]]
  $region30: #{tpu_custom_call.1} parent=0
    _
  %s6 = ssub.s32 1, %s4
  %s7 = scalar_select 0, %s6, %s4
  $region1: #{tpu_custom_call.1} parent=0
    #allocation2 [shape = 'u8[16384]{0}', space=vmem, size = 0x4000, scoped, tag = 'input window, operand 0, single buffered']
    #allocation3 [shape = 's32[1]{0}', space=sflag, size = 0x4, scoped, tag = 'scoped memory for tpu_custom_call.1']
    #allocation4 [shape = 's32[1]{0}', space=sflag, size = 0x4, scoped, tag = 'scoped memory for tpu_custom_call.1']
    #allocation5 [shape = 'u8[262144]{0}', space=vmem, size = 0x40000, scoped, tag = 'input window, operand 1, single buffered']
    #allocation6 [shape = 's32[1]{0}', space=sflag, size = 0x4, scoped, tag = 'scoped memory for tpu_custom_call.1']
    #allocation7 [shape = 'u8[4096]{0}', space=vmem, size = 0x1000, scoped, tag = 'output window, operand 0, single buffered']
    %8 = vsyncpa [#allocation3], 0
    %9 = vsyncpa [#allocation6], 0
    %10 = vsyncpa [#allocation4], 0
    // Predicated region
    $region2: #{tpu_custom_call.1} parent=1 // pred_check
      _
    $region3: #{tpu_custom_call.1} parent=1 // pred_check_branch
      %12 = sbr.rel (0) target = $region5
    $region4: #{tpu_custom_call.1} parent=1 // pred_region
      %s14 = ssub.s32 512, 512
      %15 = vsyncadd [#allocation3], %s14
      %s17 = sshll.u32 [#allocation2], 4
      %s18 = int_to_ptr.vmem [resolvable:$true] %s17
      %20 = dma.hbm_to_vmem [thread:$0]  %s0, 512, %s18, [#allocation3]
    $region5: #{tpu_custom_call.1} parent=1 // pred_fallthru
      _
    // Predicated region
    $region6: #{tpu_custom_call.1} parent=1 // pred_check
      _
    $region7: #{tpu_custom_call.1} parent=1 // pred_check_branch
      %22 = sbr.rel (0) target = $region9
    $region8: #{tpu_custom_call.1} parent=1 // pred_region
      %s24 = ssub.s32 8192, 8192
      %25 = vsyncadd [#allocation6], %s24
      %s26 = sshll.u32 [#allocation5], 4
      %s27 = int_to_ptr.vmem [resolvable:$true] %s26
      %32 = dma.hbm_to_vmem [thread:$0]  %s1, 8192, %s27, [#allocation6], 64, 64, 4
    $region9: #{tpu_custom_call.1} parent=1 // pred_fallthru
      _
    // Predicated region
    $region10: #{tpu_custom_call.1} parent=1 // pred_check
      _
    $region11: #{tpu_custom_call.1} parent=1 // pred_check_branch
      %34 = sbr.rel (0) target = $region13
    $region12: #{tpu_custom_call.1} parent=1 // pred_region
      _
    $region13: #{tpu_custom_call.1} parent=1 // pred_fallthru
      _
    // Predicated region
    $region14: #{tpu_custom_call.1} parent=1 // pred_check
      _
    $region15: #{tpu_custom_call.1} parent=1 // pred_check_branch
      %36 = sbr.rel (0) target = $region17
    $region16: #{tpu_custom_call.1} parent=1 // pred_region
      %37 = dma.done [#allocation3], 512
    $region17: #{tpu_custom_call.1} parent=1 // pred_fallthru
      _
    // Predicated region
    $region18: #{tpu_custom_call.1} parent=1 // pred_check
      _
    $region19: #{tpu_custom_call.1} parent=1 // pred_check_branch
      %39 = sbr.rel (0) target = $region21
    $region20: #{tpu_custom_call.1} parent=1 // pred_region
      %40 = dma.done [#allocation6], 8192
    $region21: #{tpu_custom_call.1} parent=1 // pred_fallthru
      _
    %v42 = vld [vmem:[#allocation2] sm:$0xff]
    %v43 = vld [vmem:[#allocation2 + $0x8] sm:$0xff]
    %v44 = vld [vmem:[#allocation2 + $0x10] sm:$0xff]
    %v45 = vld [vmem:[#allocation2 + $0x18] sm:$0xff]
    %v46 = vld [vmem:[#allocation5] sm:$0xf]
    %v47 = vld [vmem:[#allocation5 + $0x4] sm:$0xf]
    %v48 = vld [vmem:[#allocation5 + $0x8] sm:$0xf]
    %v49 = vld [vmem:[#allocation5 + $0xc] sm:$0xf]
    %v50 = vld [vmem:[#allocation5 + $0x10] sm:$0xf]
    %v51 = vld [vmem:[#allocation5 + $0x14] sm:$0xf]
    %v52 = vld [vmem:[#allocation5 + $0x18] sm:$0xf]
    %v53 = vld [vmem:[#allocation5 + $0x1c] sm:$0xf]
    %v54 = vld [vmem:[#allocation5 + $0x20] sm:$0xf]
    %v55 = vld [vmem:[#allocation5 + $0x24] sm:$0xf]
    %v56 = vld [vmem:[#allocation5 + $0x28] sm:$0xf]
    %v57 = vld [vmem:[#allocation5 + $0x2c] sm:$0xf]
    %v58 = vld [vmem:[#allocation5 + $0x30] sm:$0xf]
    %v59 = vld [vmem:[#allocation5 + $0x34] sm:$0xf]
    %v60 = vld [vmem:[#allocation5 + $0x38] sm:$0xf]
    %v61 = vld [vmem:[#allocation5 + $0x3c] sm:$0xf]
    %v62 = vld [vmem:[#allocation5 + $0x40] sm:$0xf]
    %v63 = vld [vmem:[#allocation5 + $0x44] sm:$0xf]
    %v64 = vld [vmem:[#allocation5 + $0x48] sm:$0xf]
    %v65 = vld [vmem:[#allocation5 + $0x4c] sm:$0xf]
    %v66 = vld [vmem:[#allocation5 + $0x50] sm:$0xf]
    %v67 = vld [vmem:[#allocation5 + $0x54] sm:$0xf]
    %v68 = vld [vmem:[#allocation5 + $0x58] sm:$0xf]
    %v69 = vld [vmem:[#allocation5 + $0x5c] sm:$0xf]
    %v70 = vld [vmem:[#allocation5 + $0x60] sm:$0xf]
    %v71 = vld [vmem:[#allocation5 + $0x64] sm:$0xf]
    %v72 = vld [vmem:[#allocation5 + $0x68] sm:$0xf]
    %v73 = vld [vmem:[#allocation5 + $0x6c] sm:$0xf]
    %v74 = vld [vmem:[#allocation5 + $0x70] sm:$0xf]
    %v75 = vld [vmem:[#allocation5 + $0x74] sm:$0xf]
    %v76 = vld [vmem:[#allocation5 + $0x78] sm:$0xf]
    %v77 = vld [vmem:[#allocation5 + $0x7c] sm:$0xf]
    %v78 = vld [vmem:[#allocation5 + $0x80] sm:$0xf]
    %v79 = vld [vmem:[#allocation5 + $0x84] sm:$0xf]
    %v80 = vld [vmem:[#allocation5 + $0x88] sm:$0xf]
    %v81 = vld [vmem:[#allocation5 + $0x8c] sm:$0xf]
    %v82 = vld [vmem:[#allocation5 + $0x90] sm:$0xf]
    %v83 = vld [vmem:[#allocation5 + $0x94] sm:$0xf]
    %v84 = vld [vmem:[#allocation5 + $0x98] sm:$0xf]
    %v85 = vld [vmem:[#allocation5 + $0x9c] sm:$0xf]
    %v86 = vld [vmem:[#allocation5 + $0xa0] sm:$0xf]
    %v87 = vld [vmem:[#allocation5 + $0xa4] sm:$0xf]
    %v88 = vld [vmem:[#allocation5 + $0xa8] sm:$0xf]
    %v89 = vld [vmem:[#allocation5 + $0xac] sm:$0xf]
    %v90 = vld [vmem:[#allocation5 + $0xb0] sm:$0xf]
    %v91 = vld [vmem:[#allocation5 + $0xb4] sm:$0xf]
    %v92 = vld [vmem:[#allocation5 + $0xb8] sm:$0xf]
    %v93 = vld [vmem:[#allocation5 + $0xbc] sm:$0xf]
    %v94 = vld [vmem:[#allocation5 + $0xc0] sm:$0xf]
    %v95 = vld [vmem:[#allocation5 + $0xc4] sm:$0xf]
    %v96 = vld [vmem:[#allocation5 + $0xc8] sm:$0xf]
    %v97 = vld [vmem:[#allocation5 + $0xcc] sm:$0xf]
    %v98 = vld [vmem:[#allocation5 + $0xd0] sm:$0xf]
    %v99 = vld [vmem:[#allocation5 + $0xd4] sm:$0xf]
    %v100 = vld [vmem:[#allocation5 + $0xd8] sm:$0xf]
    %v101 = vld [vmem:[#allocation5 + $0xdc] sm:$0xf]
    %v102 = vld [vmem:[#allocation5 + $0xe0] sm:$0xf]
    %v103 = vld [vmem:[#allocation5 + $0xe4] sm:$0xf]
    %v104 = vld [vmem:[#allocation5 + $0xe8] sm:$0xf]
    %v105 = vld [vmem:[#allocation5 + $0xec] sm:$0xf]
    %v106 = vld [vmem:[#allocation5 + $0xf0] sm:$0xf]
    %v107 = vld [vmem:[#allocation5 + $0xf4] sm:$0xf]
    %v108 = vld [vmem:[#allocation5 + $0xf8] sm:$0xf]
    %v109 = vld [vmem:[#allocation5 + $0xfc] sm:$0xf]
    %v110 = vld [vmem:[#allocation5 + $0x100] sm:$0xf]
    %v111 = vld [vmem:[#allocation5 + $0x104] sm:$0xf]
    %v112 = vld [vmem:[#allocation5 + $0x108] sm:$0xf]
    %v113 = vld [vmem:[#allocation5 + $0x10c] sm:$0xf]
    %v114 = vld [vmem:[#allocation5 + $0x110] sm:$0xf]
    %v115 = vld [vmem:[#allocation5 + $0x114] sm:$0xf]
    %v116 = vld [vmem:[#allocation5 + $0x118] sm:$0xf]
    %v117 = vld [vmem:[#allocation5 + $0x11c] sm:$0xf]
    %v118 = vld [vmem:[#allocation5 + $0x120] sm:$0xf]
    %v119 = vld [vmem:[#allocation5 + $0x124] sm:$0xf]
    %v120 = vld [vmem:[#allocation5 + $0x128] sm:$0xf]
    %v121 = vld [vmem:[#allocation5 + $0x12c] sm:$0xf]
    %v122 = vld [vmem:[#allocation5 + $0x130] sm:$0xf]
    %v123 = vld [vmem:[#allocation5 + $0x134] sm:$0xf]
    %v124 = vld [vmem:[#allocation5 + $0x138] sm:$0xf]
    %v125 = vld [vmem:[#allocation5 + $0x13c] sm:$0xf]
    %v126 = vld [vmem:[#allocation5 + $0x140] sm:$0xf]
    %v127 = vld [vmem:[#allocation5 + $0x144] sm:$0xf]
    %v128 = vld [vmem:[#allocation5 + $0x148] sm:$0xf]
    %v129 = vld [vmem:[#allocation5 + $0x14c] sm:$0xf]
    %v130 = vld [vmem:[#allocation5 + $0x150] sm:$0xf]
    %v131 = vld [vmem:[#allocation5 + $0x154] sm:$0xf]
    %v132 = vld [vmem:[#allocation5 + $0x158] sm:$0xf]
    %v133 = vld [vmem:[#allocation5 + $0x15c] sm:$0xf]
    %v134 = vld [vmem:[#allocation5 + $0x160] sm:$0xf]
    %v135 = vld [vmem:[#allocation5 + $0x164] sm:$0xf]
    %v136 = vld [vmem:[#allocation5 + $0x168] sm:$0xf]
    %v137 = vld [vmem:[#allocation5 + $0x16c] sm:$0xf]
    %v138 = vld [vmem:[#allocation5 + $0x170] sm:$0xf]
    %v139 = vld [vmem:[#allocation5 + $0x174] sm:$0xf]
    %v140 = vld [vmem:[#allocation5 + $0x178] sm:$0xf]
    %v141 = vld [vmem:[#allocation5 + $0x17c] sm:$0xf]
    %v142 = vld [vmem:[#allocation5 + $0x180] sm:$0xf]
    %v143 = vld [vmem:[#allocation5 + $0x184] sm:$0xf]
    %v144 = vld [vmem:[#allocation5 + $0x188] sm:$0xf]
    %v145 = vld [vmem:[#allocation5 + $0x18c] sm:$0xf]
    %v146 = vld [vmem:[#allocation5 + $0x190] sm:$0xf]
    %v147 = vld [vmem:[#allocation5 + $0x194] sm:$0xf]
    %v148 = vld [vmem:[#allocation5 + $0x198] sm:$0xf]
    %v149 = vld [vmem:[#allocation5 + $0x19c] sm:$0xf]
    %v150 = vld [vmem:[#allocation5 + $0x1a0] sm:$0xf]
    %v151 = vld [vmem:[#allocation5 + $0x1a4] sm:$0xf]
    %v152 = vld [vmem:[#allocation5 + $0x1a8] sm:$0xf]
    %v153 = vld [vmem:[#allocation5 + $0x1ac] sm:$0xf]
    %v154 = vld [vmem:[#allocation5 + $0x1b0] sm:$0xf]
    %v155 = vld [vmem:[#allocation5 + $0x1b4] sm:$0xf]
    %v156 = vld [vmem:[#allocation5 + $0x1b8] sm:$0xf]
    %v157 = vld [vmem:[#allocation5 + $0x1bc] sm:$0xf]
    %v158 = vld [vmem:[#allocation5 + $0x1c0] sm:$0xf]
    %v159 = vld [vmem:[#allocation5 + $0x1c4] sm:$0xf]
    %v160 = vld [vmem:[#allocation5 + $0x1c8] sm:$0xf]
    %v161 = vld [vmem:[#allocation5 + $0x1cc] sm:$0xf]
    %v162 = vld [vmem:[#allocation5 + $0x1d0] sm:$0xf]
    %v163 = vld [vmem:[#allocation5 + $0x1d4] sm:$0xf]
    %v164 = vld [vmem:[#allocation5 + $0x1d8] sm:$0xf]
    %v165 = vld [vmem:[#allocation5 + $0x1dc] sm:$0xf]
    %v166 = vld [vmem:[#allocation5 + $0x1e0] sm:$0xf]
    %v167 = vld [vmem:[#allocation5 + $0x1e4] sm:$0xf]
    %v168 = vld [vmem:[#allocation5 + $0x1e8] sm:$0xf]
    %v169 = vld [vmem:[#allocation5 + $0x1ec] sm:$0xf]
    %v170 = vld [vmem:[#allocation5 + $0x1f0] sm:$0xf]
    %v171 = vld [vmem:[#allocation5 + $0x1f4] sm:$0xf]
    %v172 = vld [vmem:[#allocation5 + $0x1f8] sm:$0xf]
    %v173 = vld [vmem:[#allocation5 + $0x1fc] sm:$0xf]
    %v174 = vld [vmem:[%s2] sm:$0x1]
    %v176 = vlaneseq
    %v177 = vshrl.u32 %v176, 7
    %v178 = vsub.s32 0, %v177
    %v179 = vrot.slane %v174, %v178
    %v185 = vunpack.c.l.b16 %v42
    %v186 = vunpack.c.h.b16 %v42
    %v187 = vunpack.c.l.b16 %v43
    %v188 = vunpack.c.h.b16 %v43
    %v189 = vunpack.c.l.b16 %v44
    %v190 = vunpack.c.h.b16 %v44
    %v191 = vunpack.c.l.b16 %v45
    %v192 = vunpack.c.h.b16 %v45
    %v193 = vpack.c.b16 %v185, %v185
    %v194 = vpack.c.b16 %v186, %v186
    %v195 = vpack.c.b16 %v187, %v187
    %v196 = vpack.c.b16 %v188, %v188
    %v197 = vpack.c.b16 %v189, %v189
    %v198 = vpack.c.b16 %v190, %v190
    %v199 = vpack.c.b16 %v191, %v191
    %v200 = vpack.c.b16 %v192, %v192
    %v337 = vunpack.c.l.b16 %v46
    %v338 = vunpack.c.l.b16 %v47
    %v339 = vunpack.c.l.b16 %v48
    %v340 = vunpack.c.l.b16 %v49
    %v341 = vunpack.c.l.b16 %v50
    %v342 = vunpack.c.l.b16 %v51
    %v343 = vunpack.c.l.b16 %v52
    %v344 = vunpack.c.l.b16 %v53
    %v345 = vunpack.c.l.b16 %v54
    %v346 = vunpack.c.l.b16 %v55
    %v347 = vunpack.c.l.b16 %v56
    %v348 = vunpack.c.l.b16 %v57
    %v349 = vunpack.c.l.b16 %v58
    %v350 = vunpack.c.l.b16 %v59
    %v351 = vunpack.c.l.b16 %v60
    %v352 = vunpack.c.l.b16 %v61
    %v353 = vunpack.c.l.b16 %v62
    %v354 = vunpack.c.l.b16 %v63
    %v355 = vunpack.c.l.b16 %v64
    %v356 = vunpack.c.l.b16 %v65
    %v357 = vunpack.c.l.b16 %v66
    %v358 = vunpack.c.l.b16 %v67
    %v359 = vunpack.c.l.b16 %v68
    %v360 = vunpack.c.l.b16 %v69
    %v361 = vunpack.c.l.b16 %v70
    %v362 = vunpack.c.l.b16 %v71
    %v363 = vunpack.c.l.b16 %v72
    %v364 = vunpack.c.l.b16 %v73
    %v365 = vunpack.c.l.b16 %v74
    %v366 = vunpack.c.l.b16 %v75
    %v367 = vunpack.c.l.b16 %v76
    %v368 = vunpack.c.l.b16 %v77
    %v369 = vunpack.c.l.b16 %v78
    %v370 = vunpack.c.l.b16 %v79
    %v371 = vunpack.c.l.b16 %v80
    %v372 = vunpack.c.l.b16 %v81
    %v373 = vunpack.c.l.b16 %v82
    %v374 = vunpack.c.l.b16 %v83
    %v375 = vunpack.c.l.b16 %v84
    %v376 = vunpack.c.l.b16 %v85
    %v377 = vunpack.c.l.b16 %v86
    %v378 = vunpack.c.l.b16 %v87
    %v379 = vunpack.c.l.b16 %v88
    %v380 = vunpack.c.l.b16 %v89
    %v381 = vunpack.c.l.b16 %v90
    %v382 = vunpack.c.l.b16 %v91
    %v383 = vunpack.c.l.b16 %v92
    %v384 = vunpack.c.l.b16 %v93
    %v385 = vunpack.c.l.b16 %v94
    %v386 = vunpack.c.l.b16 %v95
    %v387 = vunpack.c.l.b16 %v96
    %v388 = vunpack.c.l.b16 %v97
    %v389 = vunpack.c.l.b16 %v98
    %v390 = vunpack.c.l.b16 %v99
    %v391 = vunpack.c.l.b16 %v100
    %v392 = vunpack.c.l.b16 %v101
    %v393 = vunpack.c.l.b16 %v102
    %v394 = vunpack.c.l.b16 %v103
    %v395 = vunpack.c.l.b16 %v104
    %v396 = vunpack.c.l.b16 %v105
    %v397 = vunpack.c.l.b16 %v106
    %v398 = vunpack.c.l.b16 %v107
    %v399 = vunpack.c.l.b16 %v108
    %v400 = vunpack.c.l.b16 %v109
    %v401 = vunpack.c.l.b16 %v110
    %v402 = vunpack.c.l.b16 %v111
    %v403 = vunpack.c.l.b16 %v112
    %v404 = vunpack.c.l.b16 %v113
    %v405 = vunpack.c.l.b16 %v114
    %v406 = vunpack.c.l.b16 %v115
    %v407 = vunpack.c.l.b16 %v116
    %v408 = vunpack.c.l.b16 %v117
    %v409 = vunpack.c.l.b16 %v118
    %v410 = vunpack.c.l.b16 %v119
    %v411 = vunpack.c.l.b16 %v120
    %v412 = vunpack.c.l.b16 %v121
    %v413 = vunpack.c.l.b16 %v122
    %v414 = vunpack.c.l.b16 %v123
    %v415 = vunpack.c.l.b16 %v124
    %v416 = vunpack.c.l.b16 %v125
    %v417 = vunpack.c.l.b16 %v126
    %v418 = vunpack.c.l.b16 %v127
    %v419 = vunpack.c.l.b16 %v128
    %v420 = vunpack.c.l.b16 %v129
    %v421 = vunpack.c.l.b16 %v130
    %v422 = vunpack.c.l.b16 %v131
    %v423 = vunpack.c.l.b16 %v132
    %v424 = vunpack.c.l.b16 %v133
    %v425 = vunpack.c.l.b16 %v134
    %v426 = vunpack.c.l.b16 %v135
    %v427 = vunpack.c.l.b16 %v136
    %v428 = vunpack.c.l.b16 %v137
    %v429 = vunpack.c.l.b16 %v138
    %v430 = vunpack.c.l.b16 %v139
    %v431 = vunpack.c.l.b16 %v140
    %v432 = vunpack.c.l.b16 %v141
    %v433 = vunpack.c.l.b16 %v142
    %v434 = vunpack.c.l.b16 %v143
    %v435 = vunpack.c.l.b16 %v144
    %v436 = vunpack.c.l.b16 %v145
    %v437 = vunpack.c.l.b16 %v146
    %v438 = vunpack.c.l.b16 %v147
    %v439 = vunpack.c.l.b16 %v148
    %v440 = vunpack.c.l.b16 %v149
    %v441 = vunpack.c.l.b16 %v150
    %v442 = vunpack.c.l.b16 %v151
    %v443 = vunpack.c.l.b16 %v152
    %v444 = vunpack.c.l.b16 %v153
    %v445 = vunpack.c.l.b16 %v154
    %v446 = vunpack.c.l.b16 %v155
    %v447 = vunpack.c.l.b16 %v156
    %v448 = vunpack.c.l.b16 %v157
    %v449 = vunpack.c.l.b16 %v158
    %v450 = vunpack.c.l.b16 %v159
    %v451 = vunpack.c.l.b16 %v160
    %v452 = vunpack.c.l.b16 %v161
    %v453 = vunpack.c.l.b16 %v162
    %v454 = vunpack.c.l.b16 %v163
    %v455 = vunpack.c.l.b16 %v164
    %v456 = vunpack.c.l.b16 %v165
    %v457 = vunpack.c.l.b16 %v166
    %v458 = vunpack.c.l.b16 %v167
    %v459 = vunpack.c.l.b16 %v168
    %v460 = vunpack.c.l.b16 %v169
    %v461 = vunpack.c.l.b16 %v170
    %v462 = vunpack.c.l.b16 %v171
    %v463 = vunpack.c.l.b16 %v172
    %v464 = vunpack.c.l.b16 %v173
    %v465 = vpack.c.b16 %v338, %v337
    %v466 = vpack.c.b16 %v340, %v339
    %v467 = vpack.c.b16 %v342, %v341
    %v468 = vpack.c.b16 %v344, %v343
    %v469 = vpack.c.b16 %v346, %v345
    %v470 = vpack.c.b16 %v348, %v347
    %v471 = vpack.c.b16 %v350, %v349
    %v472 = vpack.c.b16 %v352, %v351
    %v473 = vpack.c.b16 %v354, %v353
    %v474 = vpack.c.b16 %v356, %v355
    %v475 = vpack.c.b16 %v358, %v357
    %v476 = vpack.c.b16 %v360, %v359
    %v477 = vpack.c.b16 %v362, %v361
    %v478 = vpack.c.b16 %v364, %v363
    %v479 = vpack.c.b16 %v366, %v365
    %v480 = vpack.c.b16 %v368, %v367
    %v481 = vpack.c.b16 %v370, %v369
    %v482 = vpack.c.b16 %v372, %v371
    %v483 = vpack.c.b16 %v374, %v373
    %v484 = vpack.c.b16 %v376, %v375
    %v485 = vpack.c.b16 %v378, %v377
    %v486 = vpack.c.b16 %v380, %v379
    %v487 = vpack.c.b16 %v382, %v381
    %v488 = vpack.c.b16 %v384, %v383
    %v489 = vpack.c.b16 %v386, %v385
    %v490 = vpack.c.b16 %v388, %v387
    %v491 = vpack.c.b16 %v390, %v389
    %v492 = vpack.c.b16 %v392, %v391
    %v493 = vpack.c.b16 %v394, %v393
    %v494 = vpack.c.b16 %v396, %v395
    %v495 = vpack.c.b16 %v398, %v397
    %v496 = vpack.c.b16 %v400, %v399
    %v497 = vpack.c.b16 %v402, %v401
    %v498 = vpack.c.b16 %v404, %v403
    %v499 = vpack.c.b16 %v406, %v405
    %v500 = vpack.c.b16 %v408, %v407
    %v501 = vpack.c.b16 %v410, %v409
    %v502 = vpack.c.b16 %v412, %v411
    %v503 = vpack.c.b16 %v414, %v413
    %v504 = vpack.c.b16 %v416, %v415
    %v505 = vpack.c.b16 %v418, %v417
    %v506 = vpack.c.b16 %v420, %v419
    %v507 = vpack.c.b16 %v422, %v421
    %v508 = vpack.c.b16 %v424, %v423
    %v509 = vpack.c.b16 %v426, %v425
    %v510 = vpack.c.b16 %v428, %v427
    %v511 = vpack.c.b16 %v430, %v429
    %v512 = vpack.c.b16 %v432, %v431
    %v513 = vpack.c.b16 %v434, %v433
    %v514 = vpack.c.b16 %v436, %v435
    %v515 = vpack.c.b16 %v438, %v437
    %v516 = vpack.c.b16 %v440, %v439
    %v517 = vpack.c.b16 %v442, %v441
    %v518 = vpack.c.b16 %v444, %v443
    %v519 = vpack.c.b16 %v446, %v445
    %v520 = vpack.c.b16 %v448, %v447
    %v521 = vpack.c.b16 %v450, %v449
    %v522 = vpack.c.b16 %v452, %v451
    %v523 = vpack.c.b16 %v454, %v453
    %v524 = vpack.c.b16 %v456, %v455
    %v525 = vpack.c.b16 %v458, %v457
    %v526 = vpack.c.b16 %v460, %v459
    %v527 = vpack.c.b16 %v462, %v461
    %v528 = vpack.c.b16 %v464, %v463
    %593 = vmatprep.subr.bf16.mxu0 0
    %594 = vmatpush1.bf16.msra.mxu0 %v465
    %595 = vmatprep.subr.bf16.mxu0 0
    %596 = vmatpush1.bf16.msra.mxu0 %v466
    %597 = vmatprep.subr.bf16.mxu0 0
    %598 = vmatpush1.bf16.msra.mxu0 %v467
    %599 = vmatprep.subr.bf16.mxu0 0
    %600 = vmatpush1.bf16.msra.mxu0 %v468
    %601 = vmatprep.subr.bf16.mxu0 0
    %602 = vmatpush1.bf16.msra.mxu0 %v469
    %603 = vmatprep.subr.bf16.mxu0 0
    %604 = vmatpush1.bf16.msra.mxu0 %v470
    %605 = vmatprep.subr.bf16.mxu0 0
    %606 = vmatpush1.bf16.msra.mxu0 %v471
    %607 = vmatprep.subr.bf16.mxu0 0
    %608 = vmatpush1.bf16.msra.mxu0 %v472
    %609 = vmatprep.subr.bf16.mxu0 0
    %610 = vmatpush1.bf16.msra.mxu0 %v473
    %611 = vmatprep.subr.bf16.mxu0 0
    %612 = vmatpush1.bf16.msra.mxu0 %v474
    %613 = vmatprep.subr.bf16.mxu0 0
    %614 = vmatpush1.bf16.msra.mxu0 %v475
    %615 = vmatprep.subr.bf16.mxu0 0
    %616 = vmatpush1.bf16.msra.mxu0 %v476
    %617 = vmatprep.subr.bf16.mxu0 0
    %618 = vmatpush1.bf16.msra.mxu0 %v477
    %619 = vmatprep.subr.bf16.mxu0 0
    %620 = vmatpush1.bf16.msra.mxu0 %v478
    %621 = vmatprep.subr.bf16.mxu0 0
    %622 = vmatpush1.bf16.msra.mxu0 %v479
    %623 = vmatprep.subr.bf16.mxu0 0
    %624 = vmatpush1.bf16.msra.mxu0 %v480
    %625 = vmatprep.mubr.bf16.mxu0 %v194
    %626 = vmatmul.mubr.bf16.gmra.mrb[0].mxu0 %v193
    %v627 = vpop.f32.mrb[0].mxu0
    %v628 = vadd.f32 %v179, %v627
    %v629 = vpop.f32.mrb[0].mxu0
    %v630 = vpop.f32.mrb[0].mxu0
    %v631 = vpop.f32.mrb[0].mxu0
    %632 = vdwg.mxu0
    %633 = vmatprep.subr.bf16.mxu0 0
    %634 = vmatpush1.bf16.msra.mxu0 %v481
    %635 = vmatprep.subr.bf16.mxu0 0
    %636 = vmatpush1.bf16.msra.mxu0 %v482
    %637 = vmatprep.subr.bf16.mxu0 0
    %638 = vmatpush1.bf16.msra.mxu0 %v483
    %639 = vmatprep.subr.bf16.mxu0 0
    %640 = vmatpush1.bf16.msra.mxu0 %v484
    %641 = vmatprep.subr.bf16.mxu0 0
    %642 = vmatpush1.bf16.msra.mxu0 %v485
    %643 = vmatprep.subr.bf16.mxu0 0
    %644 = vmatpush1.bf16.msra.mxu0 %v486
    %645 = vmatprep.subr.bf16.mxu0 0
    %646 = vmatpush1.bf16.msra.mxu0 %v487
    %647 = vmatprep.subr.bf16.mxu0 0
    %648 = vmatpush1.bf16.msra.mxu0 %v488
    %649 = vmatprep.subr.bf16.mxu0 0
    %650 = vmatpush1.bf16.msra.mxu0 %v489
    %651 = vmatprep.subr.bf16.mxu0 0
    %652 = vmatpush1.bf16.msra.mxu0 %v490
    %653 = vmatprep.subr.bf16.mxu0 0
    %654 = vmatpush1.bf16.msra.mxu0 %v491
    %655 = vmatprep.subr.bf16.mxu0 0
    %656 = vmatpush1.bf16.msra.mxu0 %v492
    %657 = vmatprep.subr.bf16.mxu0 0
    %658 = vmatpush1.bf16.msra.mxu0 %v493
    %659 = vmatprep.subr.bf16.mxu0 0
    %660 = vmatpush1.bf16.msra.mxu0 %v494
    %661 = vmatprep.subr.bf16.mxu0 0
    %662 = vmatpush1.bf16.msra.mxu0 %v495
    %663 = vmatprep.subr.bf16.mxu0 0
    %664 = vmatpush1.bf16.msra.mxu0 %v496
    %665 = vmatprep.mubr.bf16.mxu0 %v196
    %666 = vmatmul.mubr.bf16.gmra.mrb[0].mxu0 %v195
    %v667 = vpop.f32.mrb[0].mxu0
    %v668 = vadd.f32 %v628, %v667
    %v669 = vpop.f32.mrb[0].mxu0
    %v670 = vpop.f32.mrb[0].mxu0
    %v671 = vpop.f32.mrb[0].mxu0
    %672 = vdwg.mxu0
    %673 = vmatprep.subr.bf16.mxu0 0
    %674 = vmatpush1.bf16.msra.mxu0 %v497
    %675 = vmatprep.subr.bf16.mxu0 0
    %676 = vmatpush1.bf16.msra.mxu0 %v498
    %677 = vmatprep.subr.bf16.mxu0 0
    %678 = vmatpush1.bf16.msra.mxu0 %v499
    %679 = vmatprep.subr.bf16.mxu0 0
    %680 = vmatpush1.bf16.msra.mxu0 %v500
    %681 = vmatprep.subr.bf16.mxu0 0
    %682 = vmatpush1.bf16.msra.mxu0 %v501
    %683 = vmatprep.subr.bf16.mxu0 0
    %684 = vmatpush1.bf16.msra.mxu0 %v502
    %685 = vmatprep.subr.bf16.mxu0 0
    %686 = vmatpush1.bf16.msra.mxu0 %v503
    %687 = vmatprep.subr.bf16.mxu0 0
    %688 = vmatpush1.bf16.msra.mxu0 %v504
    %689 = vmatprep.subr.bf16.mxu0 0
    %690 = vmatpush1.bf16.msra.mxu0 %v505
    %691 = vmatprep.subr.bf16.mxu0 0
    %692 = vmatpush1.bf16.msra.mxu0 %v506
    %693 = vmatprep.subr.bf16.mxu0 0
    %694 = vmatpush1.bf16.msra.mxu0 %v507
    %695 = vmatprep.subr.bf16.mxu0 0
    %696 = vmatpush1.bf16.msra.mxu0 %v508
    %697 = vmatprep.subr.bf16.mxu0 0
    %698 = vmatpush1.bf16.msra.mxu0 %v509
    %699 = vmatprep.subr.bf16.mxu0 0
    %700 = vmatpush1.bf16.msra.mxu0 %v510
    %701 = vmatprep.subr.bf16.mxu0 0
    %702 = vmatpush1.bf16.msra.mxu0 %v511
    %703 = vmatprep.subr.bf16.mxu0 0
    %704 = vmatpush1.bf16.msra.mxu0 %v512
    %705 = vmatprep.mubr.bf16.mxu0 %v198
    %706 = vmatmul.mubr.bf16.gmra.mrb[0].mxu0 %v197
    %v707 = vpop.f32.mrb[0].mxu0
    %v708 = vadd.f32 %v668, %v707
    %v709 = vpop.f32.mrb[0].mxu0
    %v710 = vpop.f32.mrb[0].mxu0
    %v711 = vpop.f32.mrb[0].mxu0
    %712 = vdwg.mxu0
    %713 = vmatprep.subr.bf16.mxu0 0
    %714 = vmatpush1.bf16.msra.mxu0 %v513
    %715 = vmatprep.subr.bf16.mxu0 0
    %716 = vmatpush1.bf16.msra.mxu0 %v514
    %717 = vmatprep.subr.bf16.mxu0 0
    %718 = vmatpush1.bf16.msra.mxu0 %v515
    %719 = vmatprep.subr.bf16.mxu0 0
    %720 = vmatpush1.bf16.msra.mxu0 %v516
    %721 = vmatprep.subr.bf16.mxu0 0
    %722 = vmatpush1.bf16.msra.mxu0 %v517
    %723 = vmatprep.subr.bf16.mxu0 0
    %724 = vmatpush1.bf16.msra.mxu0 %v518
    %725 = vmatprep.subr.bf16.mxu0 0
    %726 = vmatpush1.bf16.msra.mxu0 %v519
    %727 = vmatprep.subr.bf16.mxu0 0
    %728 = vmatpush1.bf16.msra.mxu0 %v520
    %729 = vmatprep.subr.bf16.mxu0 0
    %730 = vmatpush1.bf16.msra.mxu0 %v521
    %731 = vmatprep.subr.bf16.mxu0 0
    %732 = vmatpush1.bf16.msra.mxu0 %v522
    %733 = vmatprep.subr.bf16.mxu0 0
    %734 = vmatpush1.bf16.msra.mxu0 %v523
    %735 = vmatprep.subr.bf16.mxu0 0
    %736 = vmatpush1.bf16.msra.mxu0 %v524
    %737 = vmatprep.subr.bf16.mxu0 0
    %738 = vmatpush1.bf16.msra.mxu0 %v525
    %739 = vmatprep.subr.bf16.mxu0 0
    %740 = vmatpush1.bf16.msra.mxu0 %v526
    %741 = vmatprep.subr.bf16.mxu0 0
    %742 = vmatpush1.bf16.msra.mxu0 %v527
    %743 = vmatprep.subr.bf16.mxu0 0
    %744 = vmatpush1.bf16.msra.mxu0 %v528
    %745 = vmatprep.mubr.bf16.mxu0 %v200
    %746 = vmatmul.mubr.bf16.gmra.mrb[0].mxu0 %v199
    %v747 = vpop.f32.mrb[0].mxu0
    %v748 = vadd.f32 %v708, %v747
    %v749 = vpop.f32.mrb[0].mxu0
    %v750 = vpop.f32.mrb[0].mxu0
    %v751 = vpop.f32.mrb[0].mxu0
    %752 = vdwg.mxu0
    %754 = vrot.lane.b32.xlu0 %v748, 112
    %v755 = vpop.permute.xlu0 %754
    %v757 = vadd.f32 %v748, %v755
    %758 = vrot.lane.b32.xlu0 %v748, 96
    %v759 = vpop.permute.xlu0 %758
    %v761 = vadd.f32 %v757, %v759
    %v762 = vmul.f32 %v761, 0.33333334
    %764 = vrot.lane.b32.xlu0 %v762, 48
    %v765 = vpop.permute.xlu0 %764
    %vm767 = vcmask 392192
    %v768 = vsel %vm767, %v748, %v765
    %vm769 = vcmask 523264
    %v770 = vsel %vm769, %v768, 0.0
    %771 = vst [vmem:[#allocation7] sm:$0xff] %v770
    // Predicated region
    $region22: #{tpu_custom_call.1} parent=1 // pred_check
      _
    $region23: #{tpu_custom_call.1} parent=1 // pred_check_branch
      %773 = sbr.rel (0) target = $region25
    $region24: #{tpu_custom_call.1} parent=1 // pred_region
      %s775 = ssub.s32 128, 128
      %776 = vsyncadd [#allocation4], %s775
      %s778 = sshll.u32 [#allocation7], 4
      %s779 = int_to_ptr.vmem [resolvable:$true] %s778
      %781 = dma.vmem_to_hbm [thread:$0]  %s779, 128, %s3, [#allocation4]
    $region25: #{tpu_custom_call.1} parent=1 // pred_fallthru
      _
    // Predicated region
    $region26: #{tpu_custom_call.1} parent=1 // pred_check
      _
    $region27: #{tpu_custom_call.1} parent=1 // pred_check_branch
      %783 = sbr.rel (0) target = $region29
    $region28: #{tpu_custom_call.1} parent=1 // pred_region
      %784 = dma.done [#allocation4], 128
    $region29: #{tpu_custom_call.1} parent=1 // pred_fallthru
      _
    %785 = vsyncpa [#allocation3], 1
    %786 = vsyncpa [#allocation6], 1
    %787 = vsyncpa [#allocation4], 1

</llo_original>
